<compile_context>
chip_gen: v7x
topology: tpu7x:2x2x1
jax: 0.10.0
libtpu: 0.0.40
codegen_flags: <defaults>
</compile_context>

<pallas_src>
import jax
import jax.numpy as jnp
from jax import lax
from jax.experimental import pallas as pl
from jax.experimental.pallas import tpu as pltpu


def _round_up(x, m):
    return (x + m - 1) // m * m


def _embed_kernel(idx_ref, table_ref, out_ref, acc_ref):
    """One (token-block, vocab-chunk) step of the one-hot-matmul gather.

    idx_ref:   VMEM (tn, 1)        int32  - token ids for this block.
    table_ref: VMEM (vk, ninp_pad) dtype  - current vocab chunk of the table.
    out_ref:   VMEM (tn, ninp_pad) dtype  - output tile for this token block.
    acc_ref:   VMEM (tn, ninp_pad) f32    - accumulator across vocab chunks.
    """
    k = pl.program_id(1)

    @pl.when(k == 0)
    def _():
        acc_ref[...] = jnp.zeros_like(acc_ref)

    tn = acc_ref.shape[0]
    vk = table_ref.shape[0]

    ids = idx_ref[...]                                          # (tn, 1) int32
    cols = lax.broadcasted_iota(jnp.int32, (tn, vk), 1) + k * vk
    one_hot = (ids == cols).astype(table_ref.dtype)             # (tn, vk)

    # Exact gather via MXU: exactly one 1.0 per row, padded vocab rows never hit.
    acc_ref[...] += jnp.dot(one_hot, table_ref[...],
                            preferred_element_type=jnp.float32)

    @pl.when(k == pl.num_programs(1) - 1)
    def _():
        out_ref[...] = acc_ref[...].astype(out_ref.dtype)


def embed_forward(indices, table, *, max_block_tokens=1024, max_vocab_chunk=512):
    """Pallas equivalent of Embed.forward: table[indices], shape indices.shape + (ninp,)."""
    ntoken, ninp = table.shape
    idx_shape = indices.shape
    dtype = table.dtype
    itemsize = jnp.dtype(dtype).itemsize
    packing = {4: 8, 2: 16, 1: 32}.get(itemsize, 8)   # sublane packing per dtype

    idx = indices.reshape(-1).astype(jnp.int32)
    # nn.Embedding raises on out-of-range ids; TPU has no runtime bounds check,
    # so clamp (cheap, and keeps the one-hot well defined).
    idx = jnp.clip(idx, 0, ntoken - 1)
    n = idx.shape[0]

    # Lane-dense output: pad hidden to a multiple of 128 (unmasked stores).
    ninp_pad = _round_up(ninp, 128)

    # Token block: dtype-aware sublane rounding, soft-capped so the f32 accumulator
    # tile stays a couple of MiB (fits v7x's 64 MiB VMEM comfortably).
    cap_rows_acc = max(packing, (2 * 1024 * 1024) // (ninp_pad * 4))
    tn = _round_up(min(max(n, 1), max_block_tokens, cap_rows_acc), packing)
    n_pad = _round_up(n, tn)
    if n_pad != n:
        idx = jnp.pad(idx, (0, n_pad - n))   # padded ids -> row-0 lookups, sliced off below
    num_blocks = n_pad // tn

    # Vocab chunk (contraction tile of the one-hot matmul), capped so a
    # double-buffered table tile stays a few MiB. Small vocabs -> single chunk,
    # which Pallas keeps resident (constant block index across the grid).
    cap_rows_tab = max(packing, (4 * 1024 * 1024) // (ninp_pad * itemsize))
    vk = _round_up(min(ntoken, max_vocab_chunk, cap_rows_tab), packing)
    ntoken_pad = _round_up(ntoken, vk)
    num_chunks = ntoken_pad // vk

    table_p = table
    if (ntoken_pad, ninp_pad) != (ntoken, ninp):
        table_p = jnp.pad(table, ((0, ntoken_pad - ntoken), (0, ninp_pad - ninp)))

    idx2d = idx.reshape(n_pad, 1)

    out = pl.pallas_call(
        _embed_kernel,
        out_shape=jax.ShapeDtypeStruct((n_pad, ninp_pad), dtype),
        grid_spec=pltpu.PrefetchScalarGridSpec(
            num_scalar_prefetch=0,
            grid=(num_blocks, num_chunks),
            in_specs=[
                # Token ids for this block (VMEM, ids along sublanes).
                pl.BlockSpec((tn, 1), lambda i, k: (i, 0)),
                # Current vocab chunk of the embedding table.
                pl.BlockSpec((vk, ninp_pad), lambda i, k: (k, 0)),
            ],
            out_specs=pl.BlockSpec((tn, ninp_pad), lambda i, k: (i, 0)),
            scratch_shapes=[pltpu.VMEM((tn, ninp_pad), jnp.float32)],
        ),
        compiler_params=pltpu.CompilerParams(
            # Token blocks are independent -> parallel (v7x megacore); vocab
            # chunks are a reduction -> arbitrary.
            dimension_semantics=("parallel", "arbitrary"),
        ),
    )(idx2d, table_p)

    out = out[:n, :ninp]
    return out.reshape(*idx_shape, ninp)


if __name__ == "__main__":
    key = jax.random.PRNGKey(0)
    k_idx, k_w = jax.random.split(key)

    # Small shapes implied by the module's forward: (seq, batch) int token ids,
    # small vocab, lane-dense hidden size.
    ntoken, ninp = 64, 128
    S, B = 8, 2
    pad_idx = 0

    table = jax.random.normal(k_w, (ntoken, ninp), dtype=jnp.float32)
    table = table.at[pad_idx].set(0.0)  # Embed.__init__ zeroes the <pad> row

    indices = jax.random.randint(k_idx, (S, B), 0, ntoken, dtype=jnp.int32)

    out = embed_forward(indices, table)
    jax.block_until_ready(out)

    # Correctness check against plain-JAX embedding lookup.
    ref = jnp.take(table, indices, axis=0)
    assert out.shape == (S, B, ninp)
    assert bool(jnp.allclose(out, ref, atol=1e-5, rtol=1e-5))

    print("KERNEL_OK")
</pallas_src>

<mosaic_0001>
module attributes {stable_mosaic.version = 11 : i64} {
  func.func @_embed_kernel(%arg0: i32, %arg1: i32, %arg2: memref<16x1xi32, #tpu.memory_space<vmem>>, %arg3: memref<64x128xf32, #tpu.memory_space<vmem>>, %arg4: memref<16x128xf32, #tpu.memory_space<vmem>>, %arg5: memref<16x128xf32, #tpu.memory_space<vmem>>) attributes {dimension_semantics = [#tpu.dimension_semantics<parallel>, #tpu.dimension_semantics<arbitrary>], iteration_bounds = array<i64: 1, 1>, scalar_prefetch = 0 : i64, scratch_operands = 1 : i64, tpu.core_type = #tpu.core_type<tc>, window_params = [{transform_indices = @transform_0, window_bounds = array<i64: 16, 1>}, {transform_indices = @transform_1, window_bounds = array<i64: 64, 128>}, {transform_indices = @transform_2, window_bounds = array<i64: 16, 128>}]} {
    %c0_i32 = arith.constant 0 : i32
    %0 = arith.cmpi eq, %arg1, %c0_i32 : i32
    %1 = arith.extui %0 : i1 to i32
    %c0_i32_0 = arith.constant 0 : i32
    %2 = arith.cmpi ne, %1, %c0_i32_0 : i32
    scf.if %2 {
      %cst_10 = arith.constant 0.000000e+00 : f32
      %20 = vector.broadcast %cst_10 : f32 to vector<16x128xf32>
      %c0_11 = arith.constant 0 : index
      %c0_12 = arith.constant 0 : index
      %21 = vector.load %arg5[%c0_11, %c0_12] : memref<16x128xf32, #tpu.memory_space<vmem>>, vector<16x128xf32>
      tpu.vector_store %arg5[%c0_11, %c0_12], %20 {strides = array<i32>} : memref<16x128xf32, #tpu.memory_space<vmem>>, vector<16x128xf32>,
    } else {
    }
    %c0 = arith.constant 0 : index
    %c0_1 = arith.constant 0 : index
    %3 = vector.load %arg2[%c0, %c0_1] : memref<16x1xi32, #tpu.memory_space<vmem>>, vector<16x1xi32>
    %4 = tpu.iota {dimensions = array<i32: 1>} : vector<16x64xi32>
    %c64_i32 = arith.constant 64 : i32
    %5 = arith.muli %arg1, %c64_i32 : i32
    %6 = vector.broadcast %5 : i32 to vector<16x64xi32>
    %7 = arith.addi %4, %6 : vector<16x64xi32>
    %8 = vector.broadcast %3 : vector<16x1xi32> to vector<16x64xi32>
    %9 = arith.cmpi eq, %8, %7 : vector<16x64xi32>
    %10 = arith.extui %9 : vector<16x64xi1> to vector<16x64xi32>
    %11 = arith.sitofp %10 : vector<16x64xi32> to vector<16x64xf32>
    %c0_2 = arith.constant 0 : index
    %c0_3 = arith.constant 0 : index
    %12 = vector.load %arg5[%c0_2, %c0_3] : memref<16x128xf32, #tpu.memory_space<vmem>>, vector<16x128xf32>
    %c0_4 = arith.constant 0 : index
    %c0_5 = arith.constant 0 : index
    %13 = vector.load %arg3[%c0_4, %c0_5] : memref<64x128xf32, #tpu.memory_space<vmem>>, vector<64x128xf32>
    %cst = arith.constant dense<0.000000e+00> : vector<16x128xf32>
    %14 = tpu.matmul %11, %13, %cst {dimension_numbers = #tpu.dot_dimension_numbers<[1], [0], [0], [1], [0, 0, 1, 1], [], []>} : vector<16x64xf32>, vector<64x128xf32>, vector<16x128xf32> -> vector<16x128xf32>
    %15 = arith.addf %12, %14 : vector<16x128xf32>
    %c0_6 = arith.constant 0 : index
    %c0_7 = arith.constant 0 : index
    %16 = vector.load %arg5[%c0_6, %c0_7] : memref<16x128xf32, #tpu.memory_space<vmem>>, vector<16x128xf32>
    tpu.vector_store %arg5[%c0_6, %c0_7], %15 {strides = array<i32>} : memref<16x128xf32, #tpu.memory_space<vmem>>, vector<16x128xf32>,
    %c0_i32_8 = arith.constant 0 : i32
    %17 = arith.cmpi eq, %arg1, %c0_i32_8 : i32
    %18 = arith.extui %17 : i1 to i32
    %c0_i32_9 = arith.constant 0 : i32
    %19 = arith.cmpi ne, %18, %c0_i32_9 : i32
    scf.if %19 {
      %c0_10 = arith.constant 0 : index
      %c0_11 = arith.constant 0 : index
      %20 = vector.load %arg5[%c0_10, %c0_11] : memref<16x128xf32, #tpu.memory_space<vmem>>, vector<16x128xf32>
      %c0_12 = arith.constant 0 : index
      %c0_13 = arith.constant 0 : index
      %21 = vector.load %arg4[%c0_12, %c0_13] : memref<16x128xf32, #tpu.memory_space<vmem>>, vector<16x128xf32>
      tpu.vector_store %arg4[%c0_12, %c0_13], %20 {strides = array<i32>} : memref<16x128xf32, #tpu.memory_space<vmem>>, vector<16x128xf32>,
    } else {
    }
    return
  }
  func.func @transform_0(%arg0: i32, %arg1: i32) -> (i32, i32) {
    %c0_i32 = arith.constant 0 : i32
    %c0_i32_0 = arith.constant 0 : i32
    return %arg0, %c0_i32 : i32, i32
  }
  func.func @transform_1(%arg0: i32, %arg1: i32) -> (i32, i32) {
    %c0_i32 = arith.constant 0 : i32
    %c0_i32_0 = arith.constant 0 : i32
    return %arg1, %c0_i32 : i32, i32
  }
  func.func @transform_2(%arg0: i32, %arg1: i32) -> (i32, i32) {
    %c0_i32 = arith.constant 0 : i32
    %c0_i32_0 = arith.constant 0 : i32
    return %arg0, %c0_i32 : i32, i32
  }
}

</mosaic_0001>

<llo_original>
// kernel: tpu_custom_call.1
$region0: #{tpu_custom_call.1}
  #allocation0 [shape = 'u32[]', space=smem, size = 0x4, offset = 0x4, fixed_abs, tag = 'smem constant byte address 0x4 - core index']
  #allocation1 [shape = 'u32[144,128]{1,0:T(1,128)}', space=vmem, size = 0x12000, scoped, tag = 'internal scratch']
  #allocation2 [shape = 'f32[16,128]{1,0:T(8,128)}', space=vmem, size = 0x2000, scoped, tag = 'scratch operand']
  %s0 = inlined_call_operand.vmem [shape: s32[16,1], index: 0, kind: input, shape index: {}]
  %s1 = inlined_call_operand.hbm [shape: f32[64,128], index: 1, kind: input, shape index: {}]
  %s2 = inlined_call_operand.hbm [shape: f32[16,128], index: 2, kind: output, shape index: {}]
  %s3 = sld [smem:[#allocation0]]
  $region30: #{tpu_custom_call.1} parent=0
    _
  %s5 = ssub.s32 1, %s3
  %s6 = scalar_select 0, %s5, %s3
  $region1: #{tpu_custom_call.1} parent=0
    #allocation3 [shape = 'u8[32768]{0}', space=vmem, size = 0x8000, scoped, tag = 'input window, operand 1, single buffered']
    #allocation4 [shape = 's32[1]{0}', space=sflag, size = 0x4, scoped, tag = 'scoped memory for tpu_custom_call.1']
    #allocation5 [shape = 's32[1]{0}', space=sflag, size = 0x4, scoped, tag = 'scoped memory for tpu_custom_call.1']
    #allocation6 [shape = 'u8[8192]{0}', space=vmem, size = 0x2000, scoped, tag = 'output window, operand 0, single buffered']
    %7 = vsyncpa [#allocation4], 0
    %8 = vsyncpa [#allocation5], 0
    // Predicated region
    $region2: #{tpu_custom_call.1} parent=1 // pred_check
      _
    $region3: #{tpu_custom_call.1} parent=1 // pred_check_branch
      %10 = sbr.rel (0) target = $region5
    $region4: #{tpu_custom_call.1} parent=1 // pred_region
      _
    $region5: #{tpu_custom_call.1} parent=1 // pred_fallthru
      _
    // Predicated region
    $region6: #{tpu_custom_call.1} parent=1 // pred_check
      _
    $region7: #{tpu_custom_call.1} parent=1 // pred_check_branch
      %12 = sbr.rel (0) target = $region9
    $region8: #{tpu_custom_call.1} parent=1 // pred_region
      %s14 = ssub.s32 1024, 1024
      %15 = vsyncadd [#allocation4], %s14
      %s16 = sshll.u32 [#allocation3], 4
      %s17 = int_to_ptr.vmem [resolvable:$true] %s16
      %22 = dma.hbm_to_vmem [thread:$0]  %s1, 1024, %s17, [#allocation4], 128, 128, 8
    $region9: #{tpu_custom_call.1} parent=1 // pred_fallthru
      _
    // Predicated region
    $region10: #{tpu_custom_call.1} parent=1 // pred_check
      _
    $region11: #{tpu_custom_call.1} parent=1 // pred_check_branch
      %24 = sbr.rel (0) target = $region13
    $region12: #{tpu_custom_call.1} parent=1 // pred_region
      %25 = dma.done [#allocation4], 1024
    $region13: #{tpu_custom_call.1} parent=1 // pred_fallthru
      _
    %p26 = scmp.eq.s32.totalorder 0, 0
    // Predicated region
    $region14: #{tpu_custom_call.1} parent=1 // pred_check
      %p27 = pneg %p26
    $region15: #{tpu_custom_call.1} parent=1 // pred_check_branch
      %29 = sbr.rel (%p27) target = $region17
    $region16: #{tpu_custom_call.1} parent=1 // pred_region
      %30 = vst [vmem:[#allocation2] sm:$0xff] 0.0
      %31 = vst [vmem:[#allocation2 + $0x8] sm:$0xff] 0.0
    $region17: #{tpu_custom_call.1} parent=1 // pred_fallthru
      _
    %v32 = vld [vmem:[%s0] sm:$0xff]
    %v33 = vld [vmem:[%s0 + $0x8] sm:$0xff]
    %v34 = vlaneseq
    %v35 = vand.u32 %v34, 127
    %s36 = smul.u32 0, 64
    %v37 = vstv %s36
    %v38 = vadd.s32 %v35, %v37
    %39 = vset.pattern.permute.xlu0 0
    %40 = vperm.xlu0 %39, %v32
    %v41 = vpop.permute.xlu0 %40
    %42 = vset.pattern.permute.xlu0 0
    %43 = vperm.xlu0 %42, %v33
    %v44 = vpop.permute.xlu0 %43
    %vm45 = vcmp.eq.s32.totalorder %v41, %v38
    %vm46 = vcmp.eq.s32.totalorder %v44, %v38
    %v47 = vsel %vm45, 1, 0
    %v48 = vsel %vm46, 1, 0
    %v49 = vcvt.s32.f32 %v47
    %v50 = vcvt.s32.f32 %v48
    %v51 = vld [vmem:[#allocation2] sm:$0xff]
    %v52 = vld [vmem:[#allocation2 + $0x8] sm:$0xff]
    %v53 = vld [vmem:[#allocation3] sm:$0xff]
    %v54 = vld [vmem:[#allocation3 + $0x8] sm:$0xff]
    %v55 = vld [vmem:[#allocation3 + $0x10] sm:$0xff]
    %v56 = vld [vmem:[#allocation3 + $0x18] sm:$0xff]
    %v57 = vld [vmem:[#allocation3 + $0x20] sm:$0xff]
    %v58 = vld [vmem:[#allocation3 + $0x28] sm:$0xff]
    %v59 = vld [vmem:[#allocation3 + $0x30] sm:$0xff]
    %v60 = vld [vmem:[#allocation3 + $0x38] sm:$0xff]
    %vm61 = vcmask 523264
    %v63 = vsel %vm61, %v49, 0
    %v66 = vsel %vm61, %v50, 0
    %68 = vmatprep.subr.mxu0 0.0
    %69 = vmatpush1.msra.mxu0 %v53
    %70 = vmatprep.subr.mxu0 0.0
    %71 = vmatpush1.msra.mxu0 %v54
    %72 = vmatprep.subr.mxu0 0.0
    %73 = vmatpush1.msra.mxu0 %v55
    %74 = vmatprep.subr.mxu0 0.0
    %75 = vmatpush1.msra.mxu0 %v56
    %76 = vmatprep.subr.mxu0 0.0
    %77 = vmatpush1.msra.mxu0 %v57
    %78 = vmatprep.subr.mxu0 0.0
    %79 = vmatpush1.msra.mxu0 %v58
    %80 = vmatprep.subr.mxu0 0.0
    %81 = vmatpush1.msra.mxu0 %v59
    %82 = vmatprep.subr.mxu0 0.0
    %83 = vmatpush1.msra.mxu0 %v60
    %84 = vmatprep.subr.mxu0 0.0
    %85 = vmatpush1.msra.mxu0 0.0
    %86 = vmatprep.subr.mxu0 0.0
    %87 = vmatpush1.msra.mxu0 0.0
    %88 = vmatprep.subr.mxu0 0.0
    %89 = vmatpush1.msra.mxu0 0.0
    %90 = vmatprep.subr.mxu0 0.0
    %91 = vmatpush1.msra.mxu0 0.0
    %92 = vmatprep.subr.mxu0 0.0
    %93 = vmatpush1.msra.mxu0 0.0
    %94 = vmatprep.subr.mxu0 0.0
    %95 = vmatpush1.msra.mxu0 0.0
    %96 = vmatprep.subr.mxu0 0.0
    %97 = vmatpush1.msra.mxu0 0.0
    %98 = vmatprep.subr.mxu0 0.0
    %99 = vmatpush1.msra.mxu0 0.0
    %100 = vmatprep.subr.mxu0 0.0
    %101 = vmatpush1.msra.mxu0 0.0
    %102 = vmatprep.subr.mxu0 0.0
    %103 = vmatpush1.msra.mxu0 0.0
    %104 = vmatprep.subr.mxu0 0.0
    %105 = vmatpush1.msra.mxu0 0.0
    %106 = vmatprep.subr.mxu0 0.0
    %107 = vmatpush1.msra.mxu0 0.0
    %108 = vmatprep.subr.mxu0 0.0
    %109 = vmatpush1.msra.mxu0 0.0
    %110 = vmatprep.subr.mxu0 0.0
    %111 = vmatpush1.msra.mxu0 0.0
    %112 = vmatprep.subr.mxu0 0.0
    %113 = vmatpush1.msra.mxu0 0.0
    %114 = vmatprep.subr.mxu0 0.0
    %115 = vmatpush1.msra.mxu0 0.0
    %116 = vmatprep.subr.mxu0 0.0
    %117 = vmatpush1.msra.mxu0 0.0
    %118 = vmatprep.subr.mxu0 0.0
    %119 = vmatpush1.msra.mxu0 0.0
    %120 = vmatprep.subr.mxu0 0.0
    %121 = vmatpush1.msra.mxu0 0.0
    %122 = vmatprep.subr.mxu0 0.0
    %123 = vmatpush1.msra.mxu0 0.0
    %124 = vmatprep.subr.mxu0 0.0
    %125 = vmatpush1.msra.mxu0 0.0
    %126 = vmatprep.subr.mxu0 0.0
    %127 = vmatpush1.msra.mxu0 0.0
    %128 = vmatprep.subr.mxu0 0.0
    %129 = vmatpush1.msra.mxu0 0.0
    %130 = vmatprep.subr.mxu0 0.0
    %131 = vmatpush1.msra.mxu0 0.0
    %132 = vmatprep.mubr.f32.mxu0 0.0
    %133 = vmatmul.mubr.f32.gmra.mrb[0].mxu0 %v63
    %v134 = vpop.f32.mrb[0].mxu0
    %v135 = vadd.f32 0.0, %v134
    %v136 = vpop.f32.mrb[0].mxu0
    %137 = vmatprep.mubr.f32.mxu0 0.0
    %138 = vmatmul.mubr.f32.gmra.mrb[0].mxu0 %v66
    %v139 = vpop.f32.mrb[0].mxu0
    %v140 = vadd.f32 0.0, %v139
    %v141 = vpop.f32.mrb[0].mxu0
    %142 = vdwg.mxu0
    %v143 = vadd.f32 %v51, %v135
    %v144 = vadd.f32 %v52, %v140
    %145 = vst [vmem:[#allocation2] sm:$0xff] %v143
    %146 = vst [vmem:[#allocation2 + $0x8] sm:$0xff] %v144
    // Predicated region
    $region18: #{tpu_custom_call.1} parent=1 // pred_check
      %p147 = pneg %p26
    $region19: #{tpu_custom_call.1} parent=1 // pred_check_branch
      %149 = sbr.rel (%p147) target = $region21
    $region20: #{tpu_custom_call.1} parent=1 // pred_region
      %v150 = vld [vmem:[#allocation2] sm:$0xff]
      %v151 = vld [vmem:[#allocation2 + $0x8] sm:$0xff]
      %152 = vst [vmem:[#allocation6] sm:$0xff] %v150
      %153 = vst [vmem:[#allocation6 + $0x8] sm:$0xff] %v151
    $region21: #{tpu_custom_call.1} parent=1 // pred_fallthru
      _
    // Predicated region
    $region22: #{tpu_custom_call.1} parent=1 // pred_check
      _
    $region23: #{tpu_custom_call.1} parent=1 // pred_check_branch
      %155 = sbr.rel (0) target = $region25
    $region24: #{tpu_custom_call.1} parent=1 // pred_region
      %s157 = ssub.s32 256, 256
      %158 = vsyncadd [#allocation5], %s157
      %s159 = sshll.u32 [#allocation6], 4
      %s160 = int_to_ptr.vmem [resolvable:$true] %s159
      %165 = dma.vmem_to_hbm [thread:$0]  %s160, 256, %s2, [#allocation5], 128, 128, 8
    $region25: #{tpu_custom_call.1} parent=1 // pred_fallthru
      _
    // Predicated region
    $region26: #{tpu_custom_call.1} parent=1 // pred_check
      _
    $region27: #{tpu_custom_call.1} parent=1 // pred_check_branch
      %167 = sbr.rel (0) target = $region29
    $region28: #{tpu_custom_call.1} parent=1 // pred_region
      %168 = dma.done [#allocation5], 256
    $region29: #{tpu_custom_call.1} parent=1 // pred_fallthru
      _
    %169 = vsyncpa [#allocation4], 1
    %170 = vsyncpa [#allocation5], 1

</llo_original>
